<compile_context>
chip_gen: v5e
topology: v5e:2x2
jax: 0.10.0
libtpu: 0.0.40
codegen_flags: <defaults>
</compile_context>

<pallas_src>
import functools

import jax
import jax.numpy as jnp
from jax.experimental import pallas as pl
from jax.experimental.pallas import tpu as pltpu

HIDDEN = 256  # fixed by the module (the `hidden` ctor arg is unused in the reference)


def _round_up(x: int, m: int) -> int:
    return (x + m - 1) // m * m


def fc_head_kernel(x_ref, w1_ref, b1_ref, w2_ref, b2_ref, out_ref, *, compute_dtype):
    # Two MXU matmuls in compute_dtype (bf16 by default) with f32 accumulation,
    # bias-add + ReLU on the VPU (free filler under MXU/DMA slack).
    x = x_ref[...].astype(compute_dtype)
    h = jnp.dot(x, w1_ref[...], preferred_element_type=jnp.float32)
    h = jnp.maximum(h + b1_ref[...], 0.0)          # (1, H) bias broadcasts vs (tile_b, H)
    o = jnp.dot(h.astype(compute_dtype), w2_ref[...],
                preferred_element_type=jnp.float32) + b2_ref[...]
    out_ref[...] = o.astype(out_ref.dtype)


def fc_head(x, w1, b1, w2, b2, *, tile_b=None, compute_dtype=jnp.bfloat16):
    B, C = x.shape
    H = w1.shape[1]
    N = w2.shape[1]

    # --- lane-dense output: pad num_classes up to a multiple of 128 ----------------
    N_pad = _round_up(max(N, 128), 128)
    if N_pad != N:
        w2 = jnp.pad(w2, ((0, 0), (0, N_pad - N)))   # zero columns -> zero outputs
        b2 = jnp.pad(b2, ((0, 0), (0, N_pad - N)))

    # --- batch tiling: pipelined, VMEM-bounded, ragged-B safe -----------------------
    # 16-row alignment covers both f32 (8-sublane) and bf16 (16-sublane) tiling.
    # For large B a 512-row tile keeps the x DMA double-buffer small enough for
    # v7x's 64 MiB VMEM while sitting near the HBM roofline; pass tile_b explicitly
    # (e.g. a multiple of 128) to tune per generation.
    if tile_b is None:
        tile_b = min(512, _round_up(B, 16))
    tile_b = _round_up(tile_b, 16)
    B_pad = _round_up(B, tile_b)
    if B_pad != B:
        x = jnp.pad(x, ((0, B_pad - B), (0, 0)))     # zero rows, sliced off below
    grid = (B_pad // tile_b,)

    # Weights are small and resident across the whole grid: cast once here.
    w1 = w1.astype(compute_dtype)
    w2 = w2.astype(compute_dtype)
    b1 = b1.astype(jnp.float32)
    b2 = b2.astype(jnp.float32)

    x_bytes = jnp.dtype(x.dtype).itemsize
    w_bytes = jnp.dtype(compute_dtype).itemsize
    cost = pl.CostEstimate(
        flops=2 * B_pad * (C * H + H * N_pad),
        transcendentals=0,
        bytes_accessed=(B_pad * C * x_bytes            # read x
                        + B_pad * N_pad * x_bytes      # write out
                        + (C * H + H * N_pad) * w_bytes
                        + (H + N_pad) * 4),
    )

    out = pl.pallas_call(
        functools.partial(fc_head_kernel, compute_dtype=compute_dtype),
        out_shape=jax.ShapeDtypeStruct((B_pad, N_pad), x.dtype),
        grid_spec=pltpu.PrefetchScalarGridSpec(
            num_scalar_prefetch=0,
            grid=grid,
            in_specs=[
                pl.BlockSpec((tile_b, C), lambda i: (i, 0)),   # x tile (pipelined)
                pl.BlockSpec((C, H), lambda i: (0, 0)),        # W1 (resident)
                pl.BlockSpec((1, H), lambda i: (0, 0)),        # b1
                pl.BlockSpec((H, N_pad), lambda i: (0, 0)),    # W2 (resident, padded)
                pl.BlockSpec((1, N_pad), lambda i: (0, 0)),    # b2 (padded)
            ],
            out_specs=pl.BlockSpec((tile_b, N_pad), lambda i: (i, 0)),  # lane-dense
        ),
        compiler_params=pltpu.CompilerParams(
            dimension_semantics=("parallel",),
        ),
        cost_estimate=cost,
    )(x, w1, b1, w2, b2)

    # Slice off batch / class padding outside the kernel.
    return out[:B, :N]


def init_params(key, in_channels, num_classes):
    # Matches FCHead._init_weight: weights ~ N(0, 0.01), biases = 0.
    k1, k2 = jax.random.split(key)
    w1 = 0.01 * jax.random.normal(k1, (in_channels, HIDDEN), dtype=jnp.float32)
    b1 = jnp.zeros((1, HIDDEN), dtype=jnp.float32)
    w2 = 0.01 * jax.random.normal(k2, (HIDDEN, num_classes), dtype=jnp.float32)
    b2 = jnp.zeros((1, num_classes), dtype=jnp.float32)
    return w1, b1, w2, b2


if __name__ == "__main__":
    key = jax.random.PRNGKey(0)
    kx, kp = jax.random.split(key)

    batch, in_channels, num_classes = 8, 32, 10
    x = jax.random.normal(kx, (batch, in_channels), dtype=jnp.float32)
    w1, b1, w2, b2 = init_params(kp, in_channels, num_classes)

    out = fc_head(x, w1, b1, w2, b2)
    out = jax.block_until_ready(out)

    # pure-JAX f32 reference; loose tolerance accounts for the bf16 MXU path.
    ref = jnp.maximum(x @ w1 + b1, 0.0) @ w2 + b2
    assert out.shape == (batch, num_classes)
    assert jnp.allclose(out, ref, atol=1e-3, rtol=2e-2), float(
        jnp.max(jnp.abs(out - ref)))

    print("KERNEL_OK")
</pallas_src>

<mosaic_0001>
module attributes {stable_mosaic.version = 11 : i64} {
  func.func @fc_head_kernel(%arg0: i32, %arg1: memref<16x32xf32, #tpu.memory_space<vmem>>, %arg2: memref<32x256xbf16, #tpu.memory_space<vmem>>, %arg3: memref<1x256xf32, #tpu.memory_space<vmem>>, %arg4: memref<256x128xbf16, #tpu.memory_space<vmem>>, %arg5: memref<1x128xf32, #tpu.memory_space<vmem>>, %arg6: memref<16x128xf32, #tpu.memory_space<vmem>>) attributes {dimension_semantics = [#tpu.dimension_semantics<parallel>], iteration_bounds = array<i64: 1>, scalar_prefetch = 0 : i64, scratch_operands = 0 : i64, tpu.core_type = #tpu.core_type<tc>, window_params = [{transform_indices = @transform_0, window_bounds = array<i64: 16, 32>}, {pipeline_mode = #tpu.pipeline_mode<synchronous>, transform_indices = @transform_1, window_bounds = array<i64: 32, 256>}, {pipeline_mode = #tpu.pipeline_mode<synchronous>, transform_indices = @transform_2, window_bounds = array<i64: 1, 256>}, {pipeline_mode = #tpu.pipeline_mode<synchronous>, transform_indices = @transform_3, window_bounds = array<i64: 256, 128>}, {pipeline_mode = #tpu.pipeline_mode<synchronous>, transform_indices = @transform_4, window_bounds = array<i64: 1, 128>}, {transform_indices = @transform_5, window_bounds = array<i64: 16, 128>}]} {
    %c0 = arith.constant 0 : index
    %c0_0 = arith.constant 0 : index
    %0 = vector.load %arg1[%c0, %c0_0] : memref<16x32xf32, #tpu.memory_space<vmem>>, vector<16x32xf32>
    %1 = arith.truncf %0 : vector<16x32xf32> to vector<16x32xbf16>
    %c0_1 = arith.constant 0 : index
    %c0_2 = arith.constant 0 : index
    %2 = vector.load %arg2[%c0_1, %c0_2] : memref<32x256xbf16, #tpu.memory_space<vmem>>, vector<32x256xbf16>
    %cst = arith.constant dense<0.000000e+00> : vector<16x256xf32>
    %3 = tpu.matmul %1, %2, %cst {dimension_numbers = #tpu.dot_dimension_numbers<[1], [0], [0], [1], [0, 0, 1, 1], [], []>} : vector<16x32xbf16>, vector<32x256xbf16>, vector<16x256xf32> -> vector<16x256xf32>
    %c0_3 = arith.constant 0 : index
    %c0_4 = arith.constant 0 : index
    %4 = vector.load %arg3[%c0_3, %c0_4] : memref<1x256xf32, #tpu.memory_space<vmem>>, vector<1x256xf32>
    %5 = vector.broadcast %4 : vector<1x256xf32> to vector<16x256xf32>
    %6 = arith.addf %3, %5 : vector<16x256xf32>
    %cst_5 = arith.constant 0.000000e+00 : f32
    %7 = vector.broadcast %cst_5 : f32 to vector<16x256xf32>
    %8 = arith.maximumf %6, %7 : vector<16x256xf32>
    %9 = arith.truncf %8 : vector<16x256xf32> to vector<16x256xbf16>
    %c0_6 = arith.constant 0 : index
    %c0_7 = arith.constant 0 : index
    %10 = vector.load %arg4[%c0_6, %c0_7] : memref<256x128xbf16, #tpu.memory_space<vmem>>, vector<256x128xbf16>
    %cst_8 = arith.constant dense<0.000000e+00> : vector<16x128xf32>
    %11 = tpu.matmul %9, %10, %cst_8 {dimension_numbers = #tpu.dot_dimension_numbers<[1], [0], [0], [1], [0, 0, 1, 1], [], []>} : vector<16x256xbf16>, vector<256x128xbf16>, vector<16x128xf32> -> vector<16x128xf32>
    %c0_9 = arith.constant 0 : index
    %c0_10 = arith.constant 0 : index
    %12 = vector.load %arg5[%c0_9, %c0_10] : memref<1x128xf32, #tpu.memory_space<vmem>>, vector<1x128xf32>
    %13 = vector.broadcast %12 : vector<1x128xf32> to vector<16x128xf32>
    %14 = arith.addf %11, %13 : vector<16x128xf32>
    %c0_11 = arith.constant 0 : index
    %c0_12 = arith.constant 0 : index
    %15 = vector.load %arg6[%c0_11, %c0_12] : memref<16x128xf32, #tpu.memory_space<vmem>>, vector<16x128xf32>
    tpu.vector_store %arg6[%c0_11, %c0_12], %14 {strides = array<i32>} : memref<16x128xf32, #tpu.memory_space<vmem>>, vector<16x128xf32>,
    return
  }
  func.func @transform_0(%arg0: i32) -> (i32, i32) {
    %c0_i32 = arith.constant 0 : i32
    %c0_i32_0 = arith.constant 0 : i32
    return %arg0, %c0_i32 : i32, i32
  }
  func.func @transform_1(%arg0: i32) -> (i32, i32) {
    %c0_i32 = arith.constant 0 : i32
    %c0_i32_0 = arith.constant 0 : i32
    %c0_i32_1 = arith.constant 0 : i32
    return %c0_i32, %c0_i32_0 : i32, i32
  }
  func.func @transform_2(%arg0: i32) -> (i32, i32) {
    %c0_i32 = arith.constant 0 : i32
    %c0_i32_0 = arith.constant 0 : i32
    %c0_i32_1 = arith.constant 0 : i32
    return %c0_i32, %c0_i32_0 : i32, i32
  }
  func.func @transform_3(%arg0: i32) -> (i32, i32) {
    %c0_i32 = arith.constant 0 : i32
    %c0_i32_0 = arith.constant 0 : i32
    %c0_i32_1 = arith.constant 0 : i32
    return %c0_i32, %c0_i32_0 : i32, i32
  }
  func.func @transform_4(%arg0: i32) -> (i32, i32) {
    %c0_i32 = arith.constant 0 : i32
    %c0_i32_0 = arith.constant 0 : i32
    %c0_i32_1 = arith.constant 0 : i32
    return %c0_i32, %c0_i32_0 : i32, i32
  }
  func.func @transform_5(%arg0: i32) -> (i32, i32) {
    %c0_i32 = arith.constant 0 : i32
    %c0_i32_0 = arith.constant 0 : i32
    return %arg0, %c0_i32 : i32, i32
  }
}

</mosaic_0001>

<llo_original>
// kernel: tpu_custom_call.1
$region0: #{tpu_custom_call.1}
  #allocation0 [shape = 'u32[]', space=smem, size = 0x4, offset = 0x4, fixed_abs, tag = 'smem constant byte address 0x4 - core index']
  #allocation1 [shape = 'u32[72,128]{1,0:T(1,128)}', space=vmem, size = 0x9000, scoped, tag = 'internal scratch']
  %s0 = inlined_call_operand.hbm [shape: f32[16,32], index: 0, kind: input, shape index: {}]
  %s1 = inlined_call_operand.hbm [shape: bf16[32,256], index: 1, kind: input, shape index: {}]
  %s2 = inlined_call_operand.hbm [shape: f32[1,256], index: 2, kind: input, shape index: {}]
  %s3 = inlined_call_operand.hbm [shape: bf16[256,128], index: 3, kind: input, shape index: {}]
  %s4 = inlined_call_operand.vmem [shape: f32[1,128], index: 4, kind: input, shape index: {}]
  %s5 = inlined_call_operand.hbm [shape: f32[16,128], index: 5, kind: output, shape index: {}]
  %s6 = sld [smem:[#allocation0]]
  $region46: #{tpu_custom_call.1} parent=0
    _
  %s8 = ssub.s32 1, %s6
  %s9 = scalar_select 0, %s8, %s6
  $region1: #{tpu_custom_call.1} parent=0
    #allocation2 [shape = 'u8[8192]{0}', space=vmem, size = 0x2000, scoped, tag = 'input window, operand 0, single buffered']
    #allocation3 [shape = 's32[1]{0}', space=sflag, size = 0x4, scoped, tag = 'scoped memory for tpu_custom_call.1']
    #allocation4 [shape = 's32[1]{0}', space=sflag, size = 0x4, scoped, tag = 'scoped memory for tpu_custom_call.1']
    #allocation5 [shape = 'u8[16384]{0}', space=vmem, size = 0x4000, scoped, tag = 'input window, operand 1, single buffered']
    #allocation6 [shape = 's32[1]{0}', space=sflag, size = 0x4, scoped, tag = 'scoped memory for tpu_custom_call.1']
    #allocation7 [shape = 'u8[1024]{0}', space=vmem, size = 0x400, scoped, tag = 'input window, operand 2, single buffered']
    #allocation8 [shape = 'u8[65536]{0}', space=vmem, size = 0x10000, scoped, tag = 'input window, operand 3, single buffered']
    #allocation9 [shape = 's32[1]{0}', space=sflag, size = 0x4, scoped, tag = 'scoped memory for tpu_custom_call.1']
    #allocation10 [shape = 'u8[8192]{0}', space=vmem, size = 0x2000, scoped, tag = 'output window, operand 0, single buffered']
    %10 = vsyncpa [#allocation3], 0
    %11 = vsyncpa [#allocation6], 0
    %12 = vsyncpa [#allocation9], 0
    %13 = vsyncpa [#allocation4], 0
    // Predicated region
    $region2: #{tpu_custom_call.1} parent=1 // pred_check
      _
    $region3: #{tpu_custom_call.1} parent=1 // pred_check_branch
      %15 = sbr.rel (0) target = $region5
    $region4: #{tpu_custom_call.1} parent=1 // pred_region
      %17 = vsyncadd [#allocation3], 0
      %s18 = sshll.u32 %s0, 4
      %s19 = int_to_ptr.hbm [resolvable:$true] %s18
      %s20 = sshll.u32 [#allocation2], 4
      %s21 = int_to_ptr.vmem [resolvable:$true] %s20
      %26 = dma.hbm_to_vmem [thread:$0]  %s19, 256, %s21, [#allocation3], 128, 128, 8
    $region5: #{tpu_custom_call.1} parent=1 // pred_fallthru
      _
    // Predicated region
    $region6: #{tpu_custom_call.1} parent=1 // pred_check
      _
    $region7: #{tpu_custom_call.1} parent=1 // pred_check_branch
      %28 = sbr.rel (0) target = $region9
    $region8: #{tpu_custom_call.1} parent=1 // pred_region
      %30 = vsyncadd [#allocation6], 0
      %s31 = sshll.u32 %s1, 4
      %s32 = int_to_ptr.hbm [resolvable:$true] %s31
      %s33 = sshll.u32 [#allocation5], 4
      %s34 = int_to_ptr.vmem [resolvable:$true] %s33
      %39 = dma.hbm_to_vmem [thread:$0]  %s32, 512, %s34, [#allocation6], 128, 128, 8
    $region9: #{tpu_custom_call.1} parent=1 // pred_fallthru
      _
    // Predicated region
    $region10: #{tpu_custom_call.1} parent=1 // pred_check
      _
    $region11: #{tpu_custom_call.1} parent=1 // pred_check_branch
      %41 = sbr.rel (0) target = $region13
    $region12: #{tpu_custom_call.1} parent=1 // pred_region
      %43 = vsyncadd [#allocation6], 0
      %s45 = sshll.u32 %s2, 4
      %s46 = int_to_ptr.hbm [resolvable:$true] %s45
      %s47 = sshll.u32 [#allocation7], 4
      %s48 = int_to_ptr.vmem [resolvable:$true] %s47
      %50 = dma.hbm_to_vmem [thread:$0]  %s46, 32, %s48, [#allocation6]
    $region13: #{tpu_custom_call.1} parent=1 // pred_fallthru
      _
    // Predicated region
    $region14: #{tpu_custom_call.1} parent=1 // pred_check
      _
    $region15: #{tpu_custom_call.1} parent=1 // pred_check_branch
      %52 = sbr.rel (0) target = $region17
    $region16: #{tpu_custom_call.1} parent=1 // pred_region
      %54 = vsyncadd [#allocation9], 0
      %s55 = sshll.u32 %s3, 4
      %s56 = int_to_ptr.hbm [resolvable:$true] %s55
      %s57 = sshll.u32 [#allocation8], 4
      %s58 = int_to_ptr.vmem [resolvable:$true] %s57
      %63 = dma.hbm_to_vmem [thread:$0]  %s56, 2048, %s58, [#allocation9], 64, 64, 4
    $region17: #{tpu_custom_call.1} parent=1 // pred_fallthru
      _
    // Predicated region
    $region18: #{tpu_custom_call.1} parent=1 // pred_check
      _
    $region19: #{tpu_custom_call.1} parent=1 // pred_check_branch
      %65 = sbr.rel (0) target = $region21
    $region20: #{tpu_custom_call.1} parent=1 // pred_region
      _
    $region21: #{tpu_custom_call.1} parent=1 // pred_fallthru
      _
    // Predicated region
    $region22: #{tpu_custom_call.1} parent=1 // pred_check
      _
    $region23: #{tpu_custom_call.1} parent=1 // pred_check_branch
      %67 = sbr.rel (0) target = $region25
    $region24: #{tpu_custom_call.1} parent=1 // pred_region
      %69 = dma.done [#allocation3], 256
    $region25: #{tpu_custom_call.1} parent=1 // pred_fallthru
      _
    // Predicated region
    $region26: #{tpu_custom_call.1} parent=1 // pred_check
      _
    $region27: #{tpu_custom_call.1} parent=1 // pred_check_branch
      %71 = sbr.rel (0) target = $region29
    $region28: #{tpu_custom_call.1} parent=1 // pred_region
      %73 = dma.done [#allocation6], 512
    $region29: #{tpu_custom_call.1} parent=1 // pred_fallthru
      _
    // Predicated region
    $region30: #{tpu_custom_call.1} parent=1 // pred_check
      _
    $region31: #{tpu_custom_call.1} parent=1 // pred_check_branch
      %75 = sbr.rel (0) target = $region33
    $region32: #{tpu_custom_call.1} parent=1 // pred_region
      %77 = dma.done [#allocation6], 32
    $region33: #{tpu_custom_call.1} parent=1 // pred_fallthru
      _
    // Predicated region
    $region34: #{tpu_custom_call.1} parent=1 // pred_check
      _
    $region35: #{tpu_custom_call.1} parent=1 // pred_check_branch
      %79 = sbr.rel (0) target = $region37
    $region36: #{tpu_custom_call.1} parent=1 // pred_region
      %81 = dma.done [#allocation9], 2048
    $region37: #{tpu_custom_call.1} parent=1 // pred_fallthru
      _
    %v83 = vld [vmem:[#allocation2] sm:$0xff]
    %v84 = vld [vmem:[#allocation2 + $0x8] sm:$0xff]
    %v85 = vpack.c.bf16 %v84, %v83
    %v86 = vld [vmem:[#allocation5] sm:$0xff]
    %v87 = vld [vmem:[#allocation5 + $0x8] sm:$0xff]
    %v88 = vld [vmem:[#allocation5 + $0x10] sm:$0xff]
    %v89 = vld [vmem:[#allocation5 + $0x18] sm:$0xff]
    %v90 = vld [vmem:[#allocation7] sm:$0x3]
    %v92 = vperm.slane %v90, 0
    %v93 = vperm.slane %v90, 1
    %v100 = vunpack.c.l.b16 %v86
    %v101 = vunpack.c.h.b16 %v86
    %v102 = vunpack.c.l.b16 %v87
    %v103 = vunpack.c.h.b16 %v87
    %v104 = vunpack.c.l.b16 %v88
    %v105 = vunpack.c.h.b16 %v88
    %v106 = vunpack.c.l.b16 %v89
    %v107 = vunpack.c.h.b16 %v89
    %v108 = vpack.c.b16 %v102, %v100
    %v109 = vpack.c.b16 %v103, %v101
    %v110 = vpack.c.b16 %v106, %v104
    %v111 = vpack.c.b16 %v107, %v105
    %vm116 = vcmask 261120
    %v118 = vsel %vm116, %v85, 0
    %120 = vmatpush.bf16.msra.mxu0 0
    %121 = vmatpush.bf16.msra.mxu0 0
    %122 = vmatpush.bf16.msra.mxu0 0
    %123 = vmatpush.bf16.msra.mxu0 0
    %124 = vmatpush.bf16.msra.mxu0 0
    %125 = vmatpush.bf16.msra.mxu0 0
    %126 = vmatpush.bf16.msra.mxu0 %v110
    %127 = vmatpush.bf16.msra.mxu0 %v108
    %128 = vmatmul.bf16.gmra.mxu0 %v118
    %v129 = vpop.f32.mrf.mxu0
    %v130 = vadd.f32 %v92, %v129
    %v131 = vpop.f32.mrf.mxu0
    %v132 = vadd.f32 %v92, %v131
    %133 = vdwg.mxu0
    %134 = vmatpush.bf16.msra.mxu0 0
    %135 = vmatpush.bf16.msra.mxu0 0
    %136 = vmatpush.bf16.msra.mxu0 0
    %137 = vmatpush.bf16.msra.mxu0 0
    %138 = vmatpush.bf16.msra.mxu0 0
    %139 = vmatpush.bf16.msra.mxu0 0
    %140 = vmatpush.bf16.msra.mxu0 %v111
    %141 = vmatpush.bf16.msra.mxu0 %v109
    %142 = vmatmul.bf16.gmra.mxu0 %v118
    %v143 = vpop.f32.mrf.mxu0
    %v144 = vadd.f32 %v93, %v143
    %v145 = vpop.f32.mrf.mxu0
    %v146 = vadd.f32 %v93, %v145
    %147 = vdwg.mxu0
    %v148 = vmax.f32 %v130, 0.0
    %v149 = vmax.f32 %v144, 0.0
    %v150 = vmax.f32 %v132, 0.0
    %v151 = vmax.f32 %v146, 0.0
    %v152 = vpack.c.bf16 %v150, %v148
    %v153 = vpack.c.bf16 %v151, %v149
    %v154 = vld [vmem:[#allocation8] sm:$0xf]
    %v155 = vld [vmem:[#allocation8 + $0x4] sm:$0xf]
    %v156 = vld [vmem:[#allocation8 + $0x8] sm:$0xf]
    %v157 = vld [vmem:[#allocation8 + $0xc] sm:$0xf]
    %v158 = vld [vmem:[#allocation8 + $0x10] sm:$0xf]
    %v159 = vld [vmem:[#allocation8 + $0x14] sm:$0xf]
    %v160 = vld [vmem:[#allocation8 + $0x18] sm:$0xf]
    %v161 = vld [vmem:[#allocation8 + $0x1c] sm:$0xf]
    %v162 = vld [vmem:[#allocation8 + $0x20] sm:$0xf]
    %v163 = vld [vmem:[#allocation8 + $0x24] sm:$0xf]
    %v164 = vld [vmem:[#allocation8 + $0x28] sm:$0xf]
    %v165 = vld [vmem:[#allocation8 + $0x2c] sm:$0xf]
    %v166 = vld [vmem:[#allocation8 + $0x30] sm:$0xf]
    %v167 = vld [vmem:[#allocation8 + $0x34] sm:$0xf]
    %v168 = vld [vmem:[#allocation8 + $0x38] sm:$0xf]
    %v169 = vld [vmem:[#allocation8 + $0x3c] sm:$0xf]
    %v170 = vld [vmem:[#allocation8 + $0x40] sm:$0xf]
    %v171 = vld [vmem:[#allocation8 + $0x44] sm:$0xf]
    %v172 = vld [vmem:[#allocation8 + $0x48] sm:$0xf]
    %v173 = vld [vmem:[#allocation8 + $0x4c] sm:$0xf]
    %v174 = vld [vmem:[#allocation8 + $0x50] sm:$0xf]
    %v175 = vld [vmem:[#allocation8 + $0x54] sm:$0xf]
    %v176 = vld [vmem:[#allocation8 + $0x58] sm:$0xf]
    %v177 = vld [vmem:[#allocation8 + $0x5c] sm:$0xf]
    %v178 = vld [vmem:[#allocation8 + $0x60] sm:$0xf]
    %v179 = vld [vmem:[#allocation8 + $0x64] sm:$0xf]
    %v180 = vld [vmem:[#allocation8 + $0x68] sm:$0xf]
    %v181 = vld [vmem:[#allocation8 + $0x6c] sm:$0xf]
    %v182 = vld [vmem:[#allocation8 + $0x70] sm:$0xf]
    %v183 = vld [vmem:[#allocation8 + $0x74] sm:$0xf]
    %v184 = vld [vmem:[#allocation8 + $0x78] sm:$0xf]
    %v185 = vld [vmem:[#allocation8 + $0x7c] sm:$0xf]
    %v186 = vld [vmem:[%s4] sm:$0x1]
    %v188 = vperm.slane %v186, 0
    %v222 = vunpack.c.l.b16 %v154
    %v223 = vunpack.c.l.b16 %v155
    %v224 = vunpack.c.l.b16 %v156
    %v225 = vunpack.c.l.b16 %v157
    %v226 = vunpack.c.l.b16 %v158
    %v227 = vunpack.c.l.b16 %v159
    %v228 = vunpack.c.l.b16 %v160
    %v229 = vunpack.c.l.b16 %v161
    %v230 = vunpack.c.l.b16 %v162
    %v231 = vunpack.c.l.b16 %v163
    %v232 = vunpack.c.l.b16 %v164
    %v233 = vunpack.c.l.b16 %v165
    %v234 = vunpack.c.l.b16 %v166
    %v235 = vunpack.c.l.b16 %v167
    %v236 = vunpack.c.l.b16 %v168
    %v237 = vunpack.c.l.b16 %v169
    %v238 = vunpack.c.l.b16 %v170
    %v239 = vunpack.c.l.b16 %v171
    %v240 = vunpack.c.l.b16 %v172
    %v241 = vunpack.c.l.b16 %v173
    %v242 = vunpack.c.l.b16 %v174
    %v243 = vunpack.c.l.b16 %v175
    %v244 = vunpack.c.l.b16 %v176
    %v245 = vunpack.c.l.b16 %v177
    %v246 = vunpack.c.l.b16 %v178
    %v247 = vunpack.c.l.b16 %v179
    %v248 = vunpack.c.l.b16 %v180
    %v249 = vunpack.c.l.b16 %v181
    %v250 = vunpack.c.l.b16 %v182
    %v251 = vunpack.c.l.b16 %v183
    %v252 = vunpack.c.l.b16 %v184
    %v253 = vunpack.c.l.b16 %v185
    %v254 = vpack.c.b16 %v223, %v222
    %v255 = vpack.c.b16 %v225, %v224
    %v256 = vpack.c.b16 %v227, %v226
    %v257 = vpack.c.b16 %v229, %v228
    %v258 = vpack.c.b16 %v231, %v230
    %v259 = vpack.c.b16 %v233, %v232
    %v260 = vpack.c.b16 %v235, %v234
    %v261 = vpack.c.b16 %v237, %v236
    %v262 = vpack.c.b16 %v239, %v238
    %v263 = vpack.c.b16 %v241, %v240
    %v264 = vpack.c.b16 %v243, %v242
    %v265 = vpack.c.b16 %v245, %v244
    %v266 = vpack.c.b16 %v247, %v246
    %v267 = vpack.c.b16 %v249, %v248
    %v268 = vpack.c.b16 %v251, %v250
    %v269 = vpack.c.b16 %v253, %v252
    %286 = vmatpush.bf16.msra.mxu0 %v261
    %287 = vmatpush.bf16.msra.mxu0 %v260
    %288 = vmatpush.bf16.msra.mxu0 %v259
    %289 = vmatpush.bf16.msra.mxu0 %v258
    %290 = vmatpush.bf16.msra.mxu0 %v257
    %291 = vmatpush.bf16.msra.mxu0 %v256
    %292 = vmatpush.bf16.msra.mxu0 %v255
    %293 = vmatpush.bf16.msra.mxu0 %v254
    %294 = vmatmul.bf16.gmra.mxu0 %v152
    %v295 = vpop.f32.mrf.mxu0
    %v296 = vadd.f32 %v188, %v295
    %v297 = vpop.f32.mrf.mxu0
    %v298 = vadd.f32 %v188, %v297
    %299 = vdwg.mxu0
    %300 = vmatpush.bf16.msra.mxu0 %v269
    %301 = vmatpush.bf16.msra.mxu0 %v268
    %302 = vmatpush.bf16.msra.mxu0 %v267
    %303 = vmatpush.bf16.msra.mxu0 %v266
    %304 = vmatpush.bf16.msra.mxu0 %v265
    %305 = vmatpush.bf16.msra.mxu0 %v264
    %306 = vmatpush.bf16.msra.mxu0 %v263
    %307 = vmatpush.bf16.msra.mxu0 %v262
    %308 = vmatmul.bf16.gmra.mxu0 %v153
    %v309 = vpop.f32.mrf.mxu0
    %v310 = vadd.f32 %v296, %v309
    %v311 = vpop.f32.mrf.mxu0
    %v312 = vadd.f32 %v298, %v311
    %313 = vdwg.mxu0
    %314 = vst [vmem:[#allocation10] sm:$0xff] %v310
    %315 = vst [vmem:[#allocation10 + $0x8] sm:$0xff] %v312
    // Predicated region
    $region38: #{tpu_custom_call.1} parent=1 // pred_check
      _
    $region39: #{tpu_custom_call.1} parent=1 // pred_check_branch
      %317 = sbr.rel (0) target = $region41
    $region40: #{tpu_custom_call.1} parent=1 // pred_region
      %319 = vsyncadd [#allocation4], 0
      %s320 = sshll.u32 [#allocation10], 4
      %s321 = int_to_ptr.vmem [resolvable:$true] %s320
      %s322 = sshll.u32 %s5, 4
      %s323 = int_to_ptr.hbm [resolvable:$true] %s322
      %328 = dma.vmem_to_hbm [thread:$0]  %s321, 256, %s323, [#allocation4], 128, 128, 8
    $region41: #{tpu_custom_call.1} parent=1 // pred_fallthru
      _
    // Predicated region
    $region42: #{tpu_custom_call.1} parent=1 // pred_check
      _
    $region43: #{tpu_custom_call.1} parent=1 // pred_check_branch
      %330 = sbr.rel (0) target = $region45
    $region44: #{tpu_custom_call.1} parent=1 // pred_region
      %332 = dma.done [#allocation4], 256
    $region45: #{tpu_custom_call.1} parent=1 // pred_fallthru
      _
    %333 = vsyncpa [#allocation3], 1
    %334 = vsyncpa [#allocation6], 1
    %335 = vsyncpa [#allocation9], 1
    %336 = vsyncpa [#allocation4], 1

</llo_original>
